<compile_context>
chip_gen: v7x
topology: tpu7x:2x2x1
jax: 0.10.0
libtpu: 0.0.40
codegen_flags: <defaults>
</compile_context>

<pallas_src>
import functools

import jax
import jax.numpy as jnp
from jax.experimental import pallas as pl
from jax.experimental.pallas import tpu as pltpu

IN_DIM = 80
H1_DIM = 64
H2_DIM = 32
OUT_DIM = 2
OUT_PAD = 128  # lane-dense padded width for the last MXU matmul


def _round_up(n, m):
    return ((n + m - 1) // m) * m


def mlp_kernel(x_ref, w1_ref, b1_ref, w2_ref, b2_ref, w3_ref, b3_ref, o_ref):
    # Layer 1: (TB,80)bf16 @ (80,64)bf16 -> f32 acc, +bias, ReLU (f32 VPU).
    h1 = jnp.dot(x_ref[...], w1_ref[...], preferred_element_type=jnp.float32)
    h1 = jnp.maximum(h1 + b1_ref[...], 0.0)
    # Layer 2: (TB,64)bf16 @ (64,32)bf16 -> f32 acc.
    h2 = jnp.dot(h1.astype(jnp.bfloat16), w2_ref[...],
                 preferred_element_type=jnp.float32)
    h2 = jnp.maximum(h2 + b2_ref[...], 0.0)
    # Layer 3: (TB,32)bf16 @ (32,128)bf16 -> f32 acc. The 128 lanes keep the
    # MXU matmul lane-dense; only the 2 real columns are stored to HBM.
    out = jnp.dot(h2.astype(jnp.bfloat16), w3_ref[...],
                  preferred_element_type=jnp.float32)
    o_ref[...] = (out[:, :OUT_DIM] + b3_ref[...]).astype(o_ref.dtype)


@functools.partial(jax.jit, static_argnames=("tb",))
def mlp_forward(x, params, *, tb=4096):
    w1, b1, w2, b2, w3, b3 = params
    B = x.shape[0]
    assert x.shape[1] == IN_DIM

    # bf16 MXU operands (f32 accumulation inside the kernel); biases stay f32.
    xb = x.astype(jnp.bfloat16)
    w1b = w1.astype(jnp.bfloat16)
    w2b = w2.astype(jnp.bfloat16)
    # Zero-pad the last weight to a lane-dense 128-wide matmul operand.
    w3b = (jnp.zeros((H2_DIM, OUT_PAD), jnp.bfloat16)
           .at[:, :OUT_DIM].set(w3.astype(jnp.bfloat16)))

    # Batch tile: big enough to amortize ~0.35us/step grid overhead, but keep
    # >=4 grid steps when the batch allows it (v7x megacore + double-buffer).
    if B <= tb:
        TB = B                                   # single full-array block
    else:
        TB = min(tb, max(256, _round_up(pl.cdiv(B, 4), 256)))
        TB = max(16, (TB // 16) * 16)            # bf16 sublane tiling
    grid = (pl.cdiv(B, TB),)

    def const_spec(arr):
        # Whole array as one block, same block every grid step -> DMA'd once,
        # stays VMEM-resident across the batch loop.
        return pl.BlockSpec(arr.shape, lambda i: (0,) * arr.ndim)

    flops = 2 * B * (IN_DIM * H1_DIM + H1_DIM * H2_DIM + H2_DIM * OUT_PAD)
    param_bytes = (int(w1b.size + w2b.size + w3b.size) * 2
                   + int(b1.size + b2.size + b3.size) * 4)
    bytes_accessed = B * IN_DIM * 2 + B * OUT_DIM * 4 + param_bytes

    out = pl.pallas_call(
        mlp_kernel,
        out_shape=jax.ShapeDtypeStruct((B, OUT_DIM), jnp.float32),
        grid=grid,
        in_specs=[
            pl.BlockSpec((TB, IN_DIM), lambda i: (i, 0)),  # x streamed on batch
            const_spec(w1b), const_spec(b1),
            const_spec(w2b), const_spec(b2),
            const_spec(w3b), const_spec(b3),
        ],
        out_specs=pl.BlockSpec((TB, OUT_DIM), lambda i: (i, 0)),
        compiler_params=pltpu.CompilerParams(
            dimension_semantics=("parallel",),
            # Fits tb<=4096 comfortably on every chip; raise to ~64 MiB on v6e
            # when sweeping tb to 8192-16384 (keep <=~28 MiB footprint on v7x).
            vmem_limit_bytes=32 * 1024 * 1024,
        ),
        cost_estimate=pl.CostEstimate(
            flops=flops, transcendentals=0, bytes_accessed=bytes_accessed),
    )(xb, w1b, b1, w2b, b2, w3b, b3)
    return out


def init_params(key):
    # Deterministic init mimicking PyTorch's default Linear init:
    # U(-1/sqrt(fan_in), 1/sqrt(fan_in)). Weights stored (in, out) so the
    # kernel computes y = x @ W + b (== x @ W_pt.T + b).
    dims = [(IN_DIM, H1_DIM), (H1_DIM, H2_DIM), (H2_DIM, OUT_DIM)]
    params = []
    for fan_in, fan_out in dims:
        kw, kb, key = jax.random.split(key, 3)
        bound = 1.0 / jnp.sqrt(jnp.float32(fan_in))
        w = jax.random.uniform(kw, (fan_in, fan_out), jnp.float32, -bound, bound)
        b = jax.random.uniform(kb, (1, fan_out), jnp.float32, -bound, bound)
        params += [w, b]
    return tuple(params)


def mlp_reference(x, params):
    w1, b1, w2, b2, w3, b3 = params
    h1 = jnp.maximum(x @ w1 + b1, 0.0)
    h2 = jnp.maximum(h1 @ w2 + b2, 0.0)
    return h2 @ w3 + b3


if __name__ == "__main__":
    key = jax.random.PRNGKey(0)
    kx, kp = jax.random.split(key)

    params = init_params(kp)

    # Small check: single full-array tile.
    B = 8
    x = jax.random.normal(kx, (B, IN_DIM), jnp.float32)
    out = jax.block_until_ready(mlp_forward(x, params))
    ref = mlp_reference(x, params)
    assert out.shape == (B, OUT_DIM)
    assert jnp.allclose(out, ref, atol=2e-2, rtol=2e-2), \
        float(jnp.max(jnp.abs(out - ref)))

    # Multi-step ragged-grid check (exercises tile streaming + masked tail).
    B2 = 40
    x2 = jax.random.normal(jax.random.PRNGKey(1), (B2, IN_DIM), jnp.float32)
    out2 = jax.block_until_ready(mlp_forward(x2, params, tb=16))
    ref2 = mlp_reference(x2, params)
    assert out2.shape == (B2, OUT_DIM)
    assert jnp.allclose(out2, ref2, atol=2e-2, rtol=2e-2), \
        float(jnp.max(jnp.abs(out2 - ref2)))

    print("KERNEL_OK")
</pallas_src>

<mosaic_0001>
module attributes {stable_mosaic.version = 11 : i64} {
  func.func @mlp_kernel(%arg0: i32, %arg1: memref<8x80xbf16, #tpu.memory_space<vmem>>, %arg2: memref<80x64xbf16, #tpu.memory_space<vmem>>, %arg3: memref<1x64xf32, #tpu.memory_space<vmem>>, %arg4: memref<64x32xbf16, #tpu.memory_space<vmem>>, %arg5: memref<1x32xf32, #tpu.memory_space<vmem>>, %arg6: memref<32x128xbf16, #tpu.memory_space<vmem>>, %arg7: memref<1x2xf32, #tpu.memory_space<vmem>>, %arg8: memref<8x2xf32, #tpu.memory_space<vmem>>) attributes {dimension_semantics = [#tpu.dimension_semantics<parallel>], iteration_bounds = array<i64: 1>, scalar_prefetch = 0 : i64, scratch_operands = 0 : i64, tpu.core_type = #tpu.core_type<tc>, window_params = [{transform_indices = @transform_0, window_bounds = array<i64: 8, 80>}, {pipeline_mode = #tpu.pipeline_mode<synchronous>, transform_indices = @transform_1, window_bounds = array<i64: 80, 64>}, {pipeline_mode = #tpu.pipeline_mode<synchronous>, transform_indices = @transform_2, window_bounds = array<i64: 1, 64>}, {pipeline_mode = #tpu.pipeline_mode<synchronous>, transform_indices = @transform_3, window_bounds = array<i64: 64, 32>}, {pipeline_mode = #tpu.pipeline_mode<synchronous>, transform_indices = @transform_4, window_bounds = array<i64: 1, 32>}, {pipeline_mode = #tpu.pipeline_mode<synchronous>, transform_indices = @transform_5, window_bounds = array<i64: 32, 128>}, {pipeline_mode = #tpu.pipeline_mode<synchronous>, transform_indices = @transform_6, window_bounds = array<i64: 1, 2>}, {transform_indices = @transform_7, window_bounds = array<i64: 8, 2>}]} {
    %c0 = arith.constant 0 : index
    %c0_0 = arith.constant 0 : index
    %0 = vector.load %arg1[%c0, %c0_0] : memref<8x80xbf16, #tpu.memory_space<vmem>>, vector<8x80xbf16>
    %c0_1 = arith.constant 0 : index
    %c0_2 = arith.constant 0 : index
    %1 = vector.load %arg2[%c0_1, %c0_2] : memref<80x64xbf16, #tpu.memory_space<vmem>>, vector<80x64xbf16>
    %cst = arith.constant dense<0.000000e+00> : vector<8x64xf32>
    %2 = tpu.matmul %0, %1, %cst {dimension_numbers = #tpu.dot_dimension_numbers<[1], [0], [0], [1], [0, 0, 1, 1], [], []>} : vector<8x80xbf16>, vector<80x64xbf16>, vector<8x64xf32> -> vector<8x64xf32>
    %c0_3 = arith.constant 0 : index
    %c0_4 = arith.constant 0 : index
    %3 = vector.load %arg3[%c0_3, %c0_4] : memref<1x64xf32, #tpu.memory_space<vmem>>, vector<1x64xf32>
    %4 = vector.broadcast %3 : vector<1x64xf32> to vector<8x64xf32>
    %5 = arith.addf %2, %4 : vector<8x64xf32>
    %cst_5 = arith.constant 0.000000e+00 : f32
    %6 = vector.broadcast %cst_5 : f32 to vector<8x64xf32>
    %7 = arith.maximumf %5, %6 : vector<8x64xf32>
    %8 = arith.truncf %7 : vector<8x64xf32> to vector<8x64xbf16>
    %c0_6 = arith.constant 0 : index
    %c0_7 = arith.constant 0 : index
    %9 = vector.load %arg4[%c0_6, %c0_7] : memref<64x32xbf16, #tpu.memory_space<vmem>>, vector<64x32xbf16>
    %cst_8 = arith.constant dense<0.000000e+00> : vector<8x32xf32>
    %10 = tpu.matmul %8, %9, %cst_8 {dimension_numbers = #tpu.dot_dimension_numbers<[1], [0], [0], [1], [0, 0, 1, 1], [], []>} : vector<8x64xbf16>, vector<64x32xbf16>, vector<8x32xf32> -> vector<8x32xf32>
    %c0_9 = arith.constant 0 : index
    %c0_10 = arith.constant 0 : index
    %11 = vector.load %arg5[%c0_9, %c0_10] : memref<1x32xf32, #tpu.memory_space<vmem>>, vector<1x32xf32>
    %12 = vector.broadcast %11 : vector<1x32xf32> to vector<8x32xf32>
    %13 = arith.addf %10, %12 : vector<8x32xf32>
    %cst_11 = arith.constant 0.000000e+00 : f32
    %14 = vector.broadcast %cst_11 : f32 to vector<8x32xf32>
    %15 = arith.maximumf %13, %14 : vector<8x32xf32>
    %16 = arith.truncf %15 : vector<8x32xf32> to vector<8x32xbf16>
    %c0_12 = arith.constant 0 : index
    %c0_13 = arith.constant 0 : index
    %17 = vector.load %arg6[%c0_12, %c0_13] : memref<32x128xbf16, #tpu.memory_space<vmem>>, vector<32x128xbf16>
    %cst_14 = arith.constant dense<0.000000e+00> : vector<8x128xf32>
    %18 = tpu.matmul %16, %17, %cst_14 {dimension_numbers = #tpu.dot_dimension_numbers<[1], [0], [0], [1], [0, 0, 1, 1], [], []>} : vector<8x32xbf16>, vector<32x128xbf16>, vector<8x128xf32> -> vector<8x128xf32>
    %19 = vector.extract_strided_slice %18 {offsets = [0, 0], sizes = [8, 2], strides = [1, 1]} : vector<8x128xf32> to vector<8x2xf32>
    %c0_15 = arith.constant 0 : index
    %c0_16 = arith.constant 0 : index
    %20 = vector.load %arg7[%c0_15, %c0_16] : memref<1x2xf32, #tpu.memory_space<vmem>>, vector<1x2xf32>
    %21 = vector.broadcast %20 : vector<1x2xf32> to vector<8x2xf32>
    %22 = arith.addf %19, %21 : vector<8x2xf32>
    %c0_17 = arith.constant 0 : index
    %c0_18 = arith.constant 0 : index
    %23 = vector.load %arg8[%c0_17, %c0_18] : memref<8x2xf32, #tpu.memory_space<vmem>>, vector<8x2xf32>
    tpu.vector_store %arg8[%c0_17, %c0_18], %22 {strides = array<i32>} : memref<8x2xf32, #tpu.memory_space<vmem>>, vector<8x2xf32>,
    return
  }
  func.func @transform_0(%arg0: i32) -> (i32, i32) {
    %c0_i32 = arith.constant 0 : i32
    %c0_i32_0 = arith.constant 0 : i32
    return %arg0, %c0_i32 : i32, i32
  }
  func.func @transform_1(%arg0: i32) -> (i32, i32) {
    %c0_i32 = arith.constant 0 : i32
    %c0_i32_0 = arith.constant 0 : i32
    %c0_i32_1 = arith.constant 0 : i32
    return %c0_i32, %c0_i32_0 : i32, i32
  }
  func.func @transform_2(%arg0: i32) -> (i32, i32) {
    %c0_i32 = arith.constant 0 : i32
    %c0_i32_0 = arith.constant 0 : i32
    %c0_i32_1 = arith.constant 0 : i32
    return %c0_i32, %c0_i32_0 : i32, i32
  }
  func.func @transform_3(%arg0: i32) -> (i32, i32) {
    %c0_i32 = arith.constant 0 : i32
    %c0_i32_0 = arith.constant 0 : i32
    %c0_i32_1 = arith.constant 0 : i32
    return %c0_i32, %c0_i32_0 : i32, i32
  }
  func.func @transform_4(%arg0: i32) -> (i32, i32) {
    %c0_i32 = arith.constant 0 : i32
    %c0_i32_0 = arith.constant 0 : i32
    %c0_i32_1 = arith.constant 0 : i32
    return %c0_i32, %c0_i32_0 : i32, i32
  }
  func.func @transform_5(%arg0: i32) -> (i32, i32) {
    %c0_i32 = arith.constant 0 : i32
    %c0_i32_0 = arith.constant 0 : i32
    %c0_i32_1 = arith.constant 0 : i32
    return %c0_i32, %c0_i32_0 : i32, i32
  }
  func.func @transform_6(%arg0: i32) -> (i32, i32) {
    %c0_i32 = arith.constant 0 : i32
    %c0_i32_0 = arith.constant 0 : i32
    %c0_i32_1 = arith.constant 0 : i32
    return %c0_i32, %c0_i32_0 : i32, i32
  }
  func.func @transform_7(%arg0: i32) -> (i32, i32) {
    %c0_i32 = arith.constant 0 : i32
    %c0_i32_0 = arith.constant 0 : i32
    return %arg0, %c0_i32 : i32, i32
  }
}

</mosaic_0001>

<llo_original>
// kernel: mlp_forward.1
$region0: #{mlp_forward.1}
  #allocation0 [shape = 'u32[]', space=smem, size = 0x4, offset = 0x4, fixed_abs, tag = 'smem constant byte address 0x4 - core index']
  #allocation1 [shape = 'u32[144,128]{1,0:T(1,128)}', space=vmem, size = 0x12000, scoped, tag = 'internal scratch']
  %s0 = inlined_call_operand.vmem [shape: bf16[8,80], index: 0, kind: input, shape index: {}]
  %s1 = inlined_call_operand.vmem [shape: bf16[80,64], index: 1, kind: input, shape index: {}]
  %s2 = inlined_call_operand.vmem [shape: f32[1,64], index: 2, kind: input, shape index: {}]
  %s3 = inlined_call_operand.vmem [shape: bf16[64,32], index: 3, kind: input, shape index: {}]
  %s4 = inlined_call_operand.vmem [shape: f32[1,32], index: 4, kind: input, shape index: {}]
  %s5 = inlined_call_operand.vmem [shape: bf16[32,128], index: 5, kind: input, shape index: {}]
  %s6 = inlined_call_operand.vmem [shape: f32[1,2], index: 6, kind: input, shape index: {}]
  %s7 = inlined_call_operand.vmem [shape: f32[8,2], index: 7, kind: output, shape index: {}]
  %s8 = sld [smem:[#allocation0]]
  $region38: #{mlp_forward.1} parent=0
    _
  %s10 = ssub.s32 1, %s8
  %s11 = scalar_select 0, %s10, %s8
  // Predicated region
  $region2: #{mlp_forward.1} parent=0 // pred_check
    _
  $region3: #{mlp_forward.1} parent=0 // pred_check_branch
    %13 = sbr.rel (0) target = $region5
  $region4: #{mlp_forward.1} parent=0 // pred_region
    _
  $region5: #{mlp_forward.1} parent=0 // pred_fallthru
    _
  // Predicated region
  $region6: #{mlp_forward.1} parent=0 // pred_check
    _
  $region7: #{mlp_forward.1} parent=0 // pred_check_branch
    %15 = sbr.rel (0) target = $region9
  $region8: #{mlp_forward.1} parent=0 // pred_region
    _
  $region9: #{mlp_forward.1} parent=0 // pred_fallthru
    _
  // Predicated region
  $region10: #{mlp_forward.1} parent=0 // pred_check
    _
  $region11: #{mlp_forward.1} parent=0 // pred_check_branch
    %17 = sbr.rel (0) target = $region13
  $region12: #{mlp_forward.1} parent=0 // pred_region
    _
  $region13: #{mlp_forward.1} parent=0 // pred_fallthru
    _
  // Predicated region
  $region14: #{mlp_forward.1} parent=0 // pred_check
    _
  $region15: #{mlp_forward.1} parent=0 // pred_check_branch
    %19 = sbr.rel (0) target = $region17
  $region16: #{mlp_forward.1} parent=0 // pred_region
    _
  $region17: #{mlp_forward.1} parent=0 // pred_fallthru
    _
  // Predicated region
  $region18: #{mlp_forward.1} parent=0 // pred_check
    _
  $region19: #{mlp_forward.1} parent=0 // pred_check_branch
    %21 = sbr.rel (0) target = $region21
  $region20: #{mlp_forward.1} parent=0 // pred_region
    _
  $region21: #{mlp_forward.1} parent=0 // pred_fallthru
    _
  // Predicated region
  $region22: #{mlp_forward.1} parent=0 // pred_check
    _
  $region23: #{mlp_forward.1} parent=0 // pred_check_branch
    %23 = sbr.rel (0) target = $region25
  $region24: #{mlp_forward.1} parent=0 // pred_region
    _
  $region25: #{mlp_forward.1} parent=0 // pred_fallthru
    _
  // Predicated region
  $region26: #{mlp_forward.1} parent=0 // pred_check
    _
  $region27: #{mlp_forward.1} parent=0 // pred_check_branch
    %25 = sbr.rel (0) target = $region29
  $region28: #{mlp_forward.1} parent=0 // pred_region
    _
  $region29: #{mlp_forward.1} parent=0 // pred_fallthru
    _
  %v27 = vld [vmem:[%s0] sm:$0xf]
  %v28 = vld [vmem:[%s1] sm:$0xf]
  %v29 = vld [vmem:[%s1 + $0x4] sm:$0xf]
  %v30 = vld [vmem:[%s1 + $0x8] sm:$0xf]
  %v31 = vld [vmem:[%s1 + $0xc] sm:$0xf]
  %v32 = vld [vmem:[%s1 + $0x10] sm:$0xf]
  %v33 = vld [vmem:[%s1 + $0x14] sm:$0xf]
  %v34 = vld [vmem:[%s1 + $0x18] sm:$0xf]
  %v35 = vld [vmem:[%s1 + $0x1c] sm:$0xf]
  %v36 = vld [vmem:[%s1 + $0x20] sm:$0xf]
  %v37 = vld [vmem:[%s1 + $0x24] sm:$0xf]
  %v38 = vld [vmem:[%s2] sm:$0x1]
  %v40 = vlaneseq
  %v41 = vshrl.u32 %v40, 7
  %v42 = vsub.s32 0, %v41
  %v43 = vrot.slane %v38, %v42
  %v55 = vunpack.c.l.b16 %v28
  %v56 = vunpack.c.l.b16 %v29
  %v57 = vunpack.c.l.b16 %v30
  %v58 = vunpack.c.l.b16 %v31
  %v59 = vunpack.c.l.b16 %v32
  %v60 = vunpack.c.l.b16 %v33
  %v61 = vunpack.c.l.b16 %v34
  %v62 = vunpack.c.l.b16 %v35
  %v63 = vunpack.c.l.b16 %v36
  %v64 = vunpack.c.l.b16 %v37
  %v65 = vpack.c.b16 %v56, %v55
  %v66 = vpack.c.b16 %v58, %v57
  %v67 = vpack.c.b16 %v60, %v59
  %v68 = vpack.c.b16 %v62, %v61
  %v69 = vpack.c.b16 %v64, %v63
  %vm75 = vcmask 654336
  %v77 = vsel %vm75, %v27, 0
  %79 = vmatprep.subr.bf16.mxu0 0
  %80 = vmatpush1.bf16.msra.mxu0 %v65
  %81 = vmatprep.subr.bf16.mxu0 0
  %82 = vmatpush1.bf16.msra.mxu0 %v66
  %83 = vmatprep.subr.bf16.mxu0 0
  %84 = vmatpush1.bf16.msra.mxu0 %v67
  %85 = vmatprep.subr.bf16.mxu0 0
  %86 = vmatpush1.bf16.msra.mxu0 %v68
  %87 = vmatprep.subr.bf16.mxu0 0
  %88 = vmatpush1.bf16.msra.mxu0 %v69
  %89 = vmatprep.subr.bf16.mxu0 0
  %90 = vmatpush1.bf16.msra.mxu0 0
  %91 = vmatprep.subr.bf16.mxu0 0
  %92 = vmatpush1.bf16.msra.mxu0 0
  %93 = vmatprep.subr.bf16.mxu0 0
  %94 = vmatpush1.bf16.msra.mxu0 0
  %95 = vmatprep.subr.bf16.mxu0 0
  %96 = vmatpush1.bf16.msra.mxu0 0
  %97 = vmatprep.subr.bf16.mxu0 0
  %98 = vmatpush1.bf16.msra.mxu0 0
  %99 = vmatprep.subr.bf16.mxu0 0
  %100 = vmatpush1.bf16.msra.mxu0 0
  %101 = vmatprep.subr.bf16.mxu0 0
  %102 = vmatpush1.bf16.msra.mxu0 0
  %103 = vmatprep.subr.bf16.mxu0 0
  %104 = vmatpush1.bf16.msra.mxu0 0
  %105 = vmatprep.subr.bf16.mxu0 0
  %106 = vmatpush1.bf16.msra.mxu0 0
  %107 = vmatprep.subr.bf16.mxu0 0
  %108 = vmatpush1.bf16.msra.mxu0 0
  %109 = vmatprep.subr.bf16.mxu0 0
  %110 = vmatpush1.bf16.msra.mxu0 0
  %111 = vmatprep.mubr.bf16.mxu0 0
  %112 = vmatmul.mubr.bf16.gmra.mrb[0].mxu0 %v77
  %v113 = vpop.f32.mrb[0].mxu0
  %v114 = vadd.f32 %v43, %v113
  %v115 = vpop.f32.mrb[0].mxu0
  %v116 = vpop.f32.mrb[0].mxu0
  %v117 = vpop.f32.mrb[0].mxu0
  %118 = vdwg.mxu0
  %v119 = vmax.f32 %v114, 0.0
  %v120 = vpack.c.bf16 %v119, %v119
  %v121 = vld [vmem:[%s3] sm:$0xf]
  %v122 = vld [vmem:[%s3 + $0x4] sm:$0xf]
  %v123 = vld [vmem:[%s3 + $0x8] sm:$0xf]
  %v124 = vld [vmem:[%s3 + $0xc] sm:$0xf]
  %v125 = vld [vmem:[%s3 + $0x10] sm:$0xf]
  %v126 = vld [vmem:[%s3 + $0x14] sm:$0xf]
  %v127 = vld [vmem:[%s3 + $0x18] sm:$0xf]
  %v128 = vld [vmem:[%s3 + $0x1c] sm:$0xf]
  %v129 = vld [vmem:[%s4] sm:$0x1]
  %v131 = vlaneseq
  %v132 = vshrl.u32 %v131, 7
  %v133 = vsub.s32 0, %v132
  %v134 = vrot.slane %v129, %v133
  %v144 = vunpack.c.l.b16 %v121
  %v145 = vunpack.c.l.b16 %v122
  %v146 = vunpack.c.l.b16 %v123
  %v147 = vunpack.c.l.b16 %v124
  %v148 = vunpack.c.l.b16 %v125
  %v149 = vunpack.c.l.b16 %v126
  %v150 = vunpack.c.l.b16 %v127
  %v151 = vunpack.c.l.b16 %v128
  %v152 = vpack.c.b16 %v145, %v144
  %v153 = vpack.c.b16 %v147, %v146
  %v154 = vpack.c.b16 %v149, %v148
  %v155 = vpack.c.b16 %v151, %v150
  %vm160 = vcmask 523264
  %v162 = vsel %vm160, %v120, 0
  %164 = vmatprep.subr.bf16.mxu0 0
  %165 = vmatpush1.bf16.msra.mxu0 %v152
  %166 = vmatprep.subr.bf16.mxu0 0
  %167 = vmatpush1.bf16.msra.mxu0 %v153
  %168 = vmatprep.subr.bf16.mxu0 0
  %169 = vmatpush1.bf16.msra.mxu0 %v154
  %170 = vmatprep.subr.bf16.mxu0 0
  %171 = vmatpush1.bf16.msra.mxu0 %v155
  %172 = vmatprep.subr.bf16.mxu0 0
  %173 = vmatpush1.bf16.msra.mxu0 0
  %174 = vmatprep.subr.bf16.mxu0 0
  %175 = vmatpush1.bf16.msra.mxu0 0
  %176 = vmatprep.subr.bf16.mxu0 0
  %177 = vmatpush1.bf16.msra.mxu0 0
  %178 = vmatprep.subr.bf16.mxu0 0
  %179 = vmatpush1.bf16.msra.mxu0 0
  %180 = vmatprep.subr.bf16.mxu0 0
  %181 = vmatpush1.bf16.msra.mxu0 0
  %182 = vmatprep.subr.bf16.mxu0 0
  %183 = vmatpush1.bf16.msra.mxu0 0
  %184 = vmatprep.subr.bf16.mxu0 0
  %185 = vmatpush1.bf16.msra.mxu0 0
  %186 = vmatprep.subr.bf16.mxu0 0
  %187 = vmatpush1.bf16.msra.mxu0 0
  %188 = vmatprep.subr.bf16.mxu0 0
  %189 = vmatpush1.bf16.msra.mxu0 0
  %190 = vmatprep.subr.bf16.mxu0 0
  %191 = vmatpush1.bf16.msra.mxu0 0
  %192 = vmatprep.subr.bf16.mxu0 0
  %193 = vmatpush1.bf16.msra.mxu0 0
  %194 = vmatprep.subr.bf16.mxu0 0
  %195 = vmatpush1.bf16.msra.mxu0 0
  %196 = vmatprep.mubr.bf16.mxu0 0
  %197 = vmatmul.mubr.bf16.gmra.mrb[0].mxu0 %v162
  %v198 = vpop.f32.mrb[0].mxu0
  %v199 = vadd.f32 %v134, %v198
  %v200 = vpop.f32.mrb[0].mxu0
  %v201 = vpop.f32.mrb[0].mxu0
  %v202 = vpop.f32.mrb[0].mxu0
  %203 = vdwg.mxu0
  %v204 = vmax.f32 %v199, 0.0
  %v205 = vpack.c.bf16 %v204, %v204
  %v206 = vld [vmem:[%s5] sm:$0xf]
  %v207 = vld [vmem:[%s5 + $0x4] sm:$0xf]
  %v208 = vld [vmem:[%s5 + $0x8] sm:$0xf]
  %v209 = vld [vmem:[%s5 + $0xc] sm:$0xf]
  %v214 = vunpack.c.l.b16 %v206
  %v215 = vunpack.c.l.b16 %v207
  %v216 = vunpack.c.l.b16 %v208
  %v217 = vunpack.c.l.b16 %v209
  %v218 = vpack.c.b16 %v215, %v214
  %v219 = vpack.c.b16 %v217, %v216
  %vm222 = vcmask 261120
  %v224 = vsel %vm222, %v205, 0
  %226 = vmatprep.subr.bf16.mxu0 0
  %227 = vmatpush1.bf16.msra.mxu0 %v218
  %228 = vmatprep.subr.bf16.mxu0 0
  %229 = vmatpush1.bf16.msra.mxu0 %v219
  %230 = vmatprep.subr.bf16.mxu0 0
  %231 = vmatpush1.bf16.msra.mxu0 0
  %232 = vmatprep.subr.bf16.mxu0 0
  %233 = vmatpush1.bf16.msra.mxu0 0
  %234 = vmatprep.subr.bf16.mxu0 0
  %235 = vmatpush1.bf16.msra.mxu0 0
  %236 = vmatprep.subr.bf16.mxu0 0
  %237 = vmatpush1.bf16.msra.mxu0 0
  %238 = vmatprep.subr.bf16.mxu0 0
  %239 = vmatpush1.bf16.msra.mxu0 0
  %240 = vmatprep.subr.bf16.mxu0 0
  %241 = vmatpush1.bf16.msra.mxu0 0
  %242 = vmatprep.subr.bf16.mxu0 0
  %243 = vmatpush1.bf16.msra.mxu0 0
  %244 = vmatprep.subr.bf16.mxu0 0
  %245 = vmatpush1.bf16.msra.mxu0 0
  %246 = vmatprep.subr.bf16.mxu0 0
  %247 = vmatpush1.bf16.msra.mxu0 0
  %248 = vmatprep.subr.bf16.mxu0 0
  %249 = vmatpush1.bf16.msra.mxu0 0
  %250 = vmatprep.subr.bf16.mxu0 0
  %251 = vmatpush1.bf16.msra.mxu0 0
  %252 = vmatprep.subr.bf16.mxu0 0
  %253 = vmatpush1.bf16.msra.mxu0 0
  %254 = vmatprep.subr.bf16.mxu0 0
  %255 = vmatpush1.bf16.msra.mxu0 0
  %256 = vmatprep.subr.bf16.mxu0 0
  %257 = vmatpush1.bf16.msra.mxu0 0
  %258 = vmatprep.mubr.bf16.mxu0 0
  %259 = vmatmul.mubr.bf16.gmra.mrb[0].mxu0 %v224
  %v260 = vpop.f32.mrb[0].mxu0
  %v261 = vadd.f32 0.0, %v260
  %v262 = vpop.f32.mrb[0].mxu0
  %v263 = vpop.f32.mrb[0].mxu0
  %v264 = vpop.f32.mrb[0].mxu0
  %265 = vdwg.mxu0
  %v266 = vld [vmem:[%s6] sm:$0x1]
  %v268 = vlaneseq
  %v269 = vshrl.u32 %v268, 7
  %v270 = vsub.s32 0, %v269
  %v271 = vrot.slane %v266, %v270
  %v273 = vadd.f32 %v261, %v271
  %vm274 = vcmask 15360
  %275 = vst.msk [vmem:[%s7] sm:$0xff] %vm274, %v273
  // Predicated region
  $region30: #{mlp_forward.1} parent=0 // pred_check
    _
  $region31: #{mlp_forward.1} parent=0 // pred_check_branch
    %277 = sbr.rel (0) target = $region33
  $region32: #{mlp_forward.1} parent=0 // pred_region
    _
  $region33: #{mlp_forward.1} parent=0 // pred_fallthru
    _
  // Predicated region
  $region34: #{mlp_forward.1} parent=0 // pred_check
    _
  $region35: #{mlp_forward.1} parent=0 // pred_check_branch
    %279 = sbr.rel (0) target = $region37
  $region36: #{mlp_forward.1} parent=0 // pred_region
    _
  $region37: #{mlp_forward.1} parent=0 // pred_fallthru
    _

</llo_original>
